<compile_context>
chip_gen: v7x
topology: tpu7x:2x2x1
jax: 0.10.0
libtpu: 0.0.40
codegen_flags: <defaults>
</compile_context>

<pallas_src>
import functools

import numpy as np
import jax
import jax.numpy as jnp
from jax.experimental import pallas as pl
from jax.experimental.pallas import tpu as pltpu


# ----------------------------------------------------------------------------
# Glue: BEV parameter computation (mirrors the PyTorch __init__ exactly)
# ----------------------------------------------------------------------------
def calculate_birds_eye_view_parameters(x_bounds, y_bounds, z_bounds):
    bev_resolution = np.array([row[2] for row in [x_bounds, y_bounds, z_bounds]],
                              dtype=np.float64)
    bev_start_position = np.array(
        [row[0] + row[2] / 2.0 for row in [x_bounds, y_bounds, z_bounds]],
        dtype=np.float64)
    bev_dimension = np.array(
        [(row[1] - row[0]) / row[2] for row in [x_bounds, y_bounds, z_bounds]],
        dtype=np.int64)
    return bev_resolution, bev_start_position, bev_dimension


def _make_interp_matrix(norm_coords, in_size):
    """Separable bilinear grid_sample weights (align_corners=True, zeros pad).

    Rows: output positions; cols: input positions. float64 numpy.
    """
    norm_coords = np.asarray(norm_coords, dtype=np.float64)
    pix = (norm_coords + 1.0) * 0.5 * (in_size - 1)      # align_corners=True
    i0 = np.floor(pix).astype(np.int64)
    i1 = i0 + 1
    w1 = pix - i0
    w0 = 1.0 - w1
    n_out = norm_coords.shape[0]
    M = np.zeros((n_out, in_size), dtype=np.float64)
    rows = np.arange(n_out)
    valid0 = (i0 >= 0) & (i0 < in_size)
    valid1 = (i1 >= 0) & (i1 < in_size)
    np.add.at(M, (rows, np.clip(i0, 0, in_size - 1)), np.where(valid0, w0, 0.0))
    np.add.at(M, (rows, np.clip(i1, 0, in_size - 1)), np.where(valid1, w1, 0.0))
    return M


# ----------------------------------------------------------------------------
# Pallas kernel
#   wy_ref : (H_out, H_in)        interpolation along height
#   wxt_ref: (W_in, W_out_pad)    interpolation along width, pre-transposed,
#                                 zero-padded to a lane-dense multiple of 128
#   x_ref  : (Cb, H_in, W_in)     Cb channels of the flattened N*C axis
#   o_ref  : (Cb, H_out, W_out_pad)
#   t_ref  : (Cb*H_in, W_out_pad) f32 VMEM scratch for the intermediate
# ----------------------------------------------------------------------------
def _slicer_kernel(wy_ref, wxt_ref, x_ref, o_ref, t_ref):
    cb, h_in, w_in = x_ref.shape

    # Stage 1: single large-M MXU matmul with all Cb channels fused on M.
    xf = x_ref[...].reshape(cb * h_in, w_in)
    t_ref[...] = jnp.dot(xf, wxt_ref[...], preferred_element_type=jnp.float32)

    # Stage 2: per-channel Wy contraction (unrolled; Cb is small).
    wy = wy_ref[...]
    for c in range(cb):
        tc = t_ref[c * h_in:(c + 1) * h_in, :].astype(wy.dtype)
        o_ref[c] = jnp.dot(wy, tc,
                           preferred_element_type=jnp.float32).astype(o_ref.dtype)


def _choose_channel_block(B, H_in, W_in, H_out, W_out_pad, dtype_bytes,
                          budget_bytes=24 * 1024 * 1024, cap=32):
    """Largest divisor of B (<= cap) whose double-buffered blocks + scratch fit
    a conservative VMEM budget (safe on v7x's 64 MiB / 32 MiB scoped default)."""
    best = 1
    for cb in range(1, min(B, cap) + 1):
        if B % cb:
            continue
        need = (2 * cb * H_in * W_in * dtype_bytes          # input double-buffer
                + 2 * cb * H_out * W_out_pad * dtype_bytes  # output double-buffer
                + cb * H_in * W_out_pad * 4)                # f32 scratch
        if need <= budget_bytes:
            best = cb
    return best


@functools.lru_cache(maxsize=None)
def _build_slicer_call(B, Cb, H_in, W_in, H_out, W_out_pad, dtype_name):
    dtype = jnp.dtype(dtype_name)
    db = dtype.itemsize
    need = (2 * Cb * H_in * W_in * db
            + 2 * Cb * H_out * W_out_pad * db
            + Cb * H_in * W_out_pad * 4
            + 2 * (H_out * H_in + W_in * W_out_pad) * db)
    vmem_limit = int(min(max(need * 5 // 4, 16 * 1024 * 1024), 60 * 1024 * 1024))

    call = pl.pallas_call(
        _slicer_kernel,
        out_shape=jax.ShapeDtypeStruct((B, H_out, W_out_pad), dtype),
        grid=(B // Cb,),
        in_specs=[
            pl.BlockSpec((H_out, H_in), lambda b: (0, 0)),
            pl.BlockSpec((W_in, W_out_pad), lambda b: (0, 0)),
            pl.BlockSpec((Cb, H_in, W_in), lambda b: (b, 0, 0)),
        ],
        out_specs=pl.BlockSpec((Cb, H_out, W_out_pad), lambda b: (b, 0, 0)),
        scratch_shapes=[pltpu.VMEM((Cb * H_in, W_out_pad), jnp.float32)],
        compiler_params=pltpu.CompilerParams(
            dimension_semantics=("parallel",),
            vmem_limit_bytes=vmem_limit),
    )
    return jax.jit(call)


# ----------------------------------------------------------------------------
# Module equivalent
# ----------------------------------------------------------------------------
class BevFeatureSlicer:
    def __init__(self, grid_conf, map_grid_conf):
        if grid_conf == map_grid_conf:
            self.identity_mapping = True
        else:
            self.identity_mapping = False
            bev_res, bev_start, _ = calculate_birds_eye_view_parameters(
                grid_conf['xbound'], grid_conf['ybound'], grid_conf['zbound'])
            map_res, map_start, _ = calculate_birds_eye_view_parameters(
                map_grid_conf['xbound'], map_grid_conf['ybound'],
                map_grid_conf['zbound'])
            map_x = np.arange(map_start[0], map_grid_conf['xbound'][1], map_res[0])
            map_y = np.arange(map_start[1], map_grid_conf['ybound'][1], map_res[1])
            self.norm_map_x = map_x / -bev_start[0]   # grid[..., 0] -> width axis
            self.norm_map_y = map_y / -bev_start[1]   # grid[..., 1] -> height axis
            self._weight_cache = {}

    def _get_weights(self, H_in, W_in, dtype):
        key = (int(H_in), int(W_in), jnp.dtype(dtype).name)
        if key not in self._weight_cache:
            wy = _make_interp_matrix(self.norm_map_y, H_in)    # (H_out, H_in)
            wx = _make_interp_matrix(self.norm_map_x, W_in)    # (W_out, W_in)
            W_out = wx.shape[0]
            W_out_pad = ((W_out + 127) // 128) * 128           # lane-dense stores
            wxt = np.zeros((W_in, W_out_pad), dtype=np.float64)
            wxt[:, :W_out] = wx.T                              # pre-transposed
            # NOTE: weights follow x.dtype; keep x in f32 for exact grid_sample
            # parity (accumulation is already forced to f32 in the kernel).
            self._weight_cache[key] = (
                jnp.asarray(wy, dtype=dtype),
                jnp.asarray(wxt, dtype=dtype),
                W_out, W_out_pad)
        return self._weight_cache[key]

    def __call__(self, x):
        if self.identity_mapping:
            return x
        N, C, H_in, W_in = x.shape
        wy, wxt, W_out, W_out_pad = self._get_weights(H_in, W_in, x.dtype)
        H_out = wy.shape[0]
        B = N * C
        Cb = _choose_channel_block(B, H_in, W_in, H_out, W_out_pad,
                                   jnp.dtype(x.dtype).itemsize)
        call = _build_slicer_call(B, Cb, H_in, W_in, H_out, W_out_pad,
                                  jnp.dtype(x.dtype).name)
        out_pad = call(wy, wxt, x.reshape(B, H_in, W_in))
        return out_pad[:, :, :W_out].reshape(N, C, H_out, W_out)


# ----------------------------------------------------------------------------
# Reference (pure numpy gather-based grid_sample, bilinear, align_corners=True)
# ----------------------------------------------------------------------------
def _ref_grid_sample(x, norm_x, norm_y):
    x = np.asarray(x)
    N, C, H, W = x.shape
    ix = (np.asarray(norm_x) + 1.0) * 0.5 * (W - 1)
    iy = (np.asarray(norm_y) + 1.0) * 0.5 * (H - 1)
    x0 = np.floor(ix).astype(int); x1 = x0 + 1
    y0 = np.floor(iy).astype(int); y1 = y0 + 1
    wx1 = ix - x0; wx0 = 1.0 - wx1
    wy1 = iy - y0; wy0 = 1.0 - wy1

    def gather(xc, yc):
        valid = ((xc[None, :] >= 0) & (xc[None, :] < W) &
                 (yc[:, None] >= 0) & (yc[:, None] < H))
        xcc = np.clip(xc, 0, W - 1)
        ycc = np.clip(yc, 0, H - 1)
        v = x[:, :, ycc[:, None], xcc[None, :]]
        return v * valid[None, None]

    out = (gather(x0, y0) * (wy0[:, None] * wx0[None, :])
           + gather(x1, y0) * (wy0[:, None] * wx1[None, :])
           + gather(x0, y1) * (wy1[:, None] * wx0[None, :])
           + gather(x1, y1) * (wy1[:, None] * wx1[None, :]))
    return out.astype(np.float32)


if __name__ == "__main__":
    # Input BEV 16x16 (1 m cells), map BEV 16x16 (0.5 m cells, half extent)
    # -> non-trivial bilinear resampling, fully in-bounds.
    grid_conf = {
        'xbound': [-8.0, 8.0, 1.0],
        'ybound': [-8.0, 8.0, 1.0],
        'zbound': [-10.0, 10.0, 20.0],
    }
    map_grid_conf = {
        'xbound': [-4.0, 4.0, 0.5],
        'ybound': [-4.0, 4.0, 0.5],
        'zbound': [-10.0, 10.0, 20.0],
    }

    slicer = BevFeatureSlicer(grid_conf, map_grid_conf)

    key = jax.random.PRNGKey(0)
    x = jax.random.normal(key, (2, 4, 16, 16), dtype=jnp.float32)

    out = slicer(x)
    out = jax.block_until_ready(out)

    ref = _ref_grid_sample(np.asarray(x), slicer.norm_map_x, slicer.norm_map_y)
    np.testing.assert_allclose(np.asarray(out), ref, rtol=1e-5, atol=1e-5)

    print("KERNEL_OK")
</pallas_src>

<mosaic_0001>
module attributes {stable_mosaic.version = 11 : i64} {
  func.func @_slicer_kernel(%arg0: i32, %arg1: memref<16x16xf32, #tpu.memory_space<vmem>>, %arg2: memref<16x128xf32, #tpu.memory_space<vmem>>, %arg3: memref<8x16x16xf32, #tpu.memory_space<vmem>>, %arg4: memref<8x16x128xf32, #tpu.memory_space<vmem>>, %arg5: memref<128x128xf32, #tpu.memory_space<vmem>>) attributes {dimension_semantics = [#tpu.dimension_semantics<parallel>], iteration_bounds = array<i64: 1>, scalar_prefetch = 0 : i64, scratch_operands = 1 : i64, tpu.core_type = #tpu.core_type<tc>, window_params = [{pipeline_mode = #tpu.pipeline_mode<synchronous>, transform_indices = @transform_0, window_bounds = array<i64: 16, 16>}, {pipeline_mode = #tpu.pipeline_mode<synchronous>, transform_indices = @transform_1, window_bounds = array<i64: 16, 128>}, {transform_indices = @transform_2, window_bounds = array<i64: 8, 16, 16>}, {transform_indices = @transform_3, window_bounds = array<i64: 8, 16, 128>}]} {
    %c0 = arith.constant 0 : index
    %c0_0 = arith.constant 0 : index
    %c0_1 = arith.constant 0 : index
    %0 = vector.load %arg3[%c0, %c0_0, %c0_1] : memref<8x16x16xf32, #tpu.memory_space<vmem>>, vector<8x16x16xf32>
    %1 = vector.shape_cast %0 : vector<8x16x16xf32> to vector<128x16xf32>
    %c0_2 = arith.constant 0 : index
    %c0_3 = arith.constant 0 : index
    %2 = vector.load %arg2[%c0_2, %c0_3] : memref<16x128xf32, #tpu.memory_space<vmem>>, vector<16x128xf32>
    %cst = arith.constant dense<0.000000e+00> : vector<128x128xf32>
    %3 = tpu.matmul %1, %2, %cst {dimension_numbers = #tpu.dot_dimension_numbers<[1], [0], [0], [1], [0, 0, 1, 1], [], []>} : vector<128x16xf32>, vector<16x128xf32>, vector<128x128xf32> -> vector<128x128xf32>
    %c0_4 = arith.constant 0 : index
    %c0_5 = arith.constant 0 : index
    %4 = vector.load %arg5[%c0_4, %c0_5] : memref<128x128xf32, #tpu.memory_space<vmem>>, vector<128x128xf32>
    tpu.vector_store %arg5[%c0_4, %c0_5], %3 {strides = array<i32>} : memref<128x128xf32, #tpu.memory_space<vmem>>, vector<128x128xf32>,
    %c0_6 = arith.constant 0 : index
    %c0_7 = arith.constant 0 : index
    %5 = vector.load %arg1[%c0_6, %c0_7] : memref<16x16xf32, #tpu.memory_space<vmem>>, vector<16x16xf32>
    %c0_8 = arith.constant 0 : index
    %c0_9 = arith.constant 0 : index
    %6 = vector.load %arg5[%c0_8, %c0_9] : memref<128x128xf32, #tpu.memory_space<vmem>>, vector<16x128xf32>
    %cst_10 = arith.constant dense<0.000000e+00> : vector<16x128xf32>
    %7 = tpu.matmul %5, %6, %cst_10 {dimension_numbers = #tpu.dot_dimension_numbers<[1], [0], [0], [1], [0, 0, 1, 1], [], []>} : vector<16x16xf32>, vector<16x128xf32>, vector<16x128xf32> -> vector<16x128xf32>
    %c0_11 = arith.constant 0 : index
    %c0_12 = arith.constant 0 : index
    %c0_13 = arith.constant 0 : index
    %8 = vector.load %arg4[%c0_11, %c0_12, %c0_13] : memref<8x16x128xf32, #tpu.memory_space<vmem>>, vector<1x16x128xf32>
    %9 = vector.shape_cast %8 : vector<1x16x128xf32> to vector<16x128xf32>
    %10 = vector.shape_cast %7 : vector<16x128xf32> to vector<1x16x128xf32>
    tpu.vector_store %arg4[%c0_11, %c0_12, %c0_13], %10 {strides = array<i32>} : memref<8x16x128xf32, #tpu.memory_space<vmem>>, vector<1x16x128xf32>,
    %c16 = arith.constant 16 : index
    %c0_14 = arith.constant 0 : index
    %11 = vector.load %arg5[%c16, %c0_14] : memref<128x128xf32, #tpu.memory_space<vmem>>, vector<16x128xf32>
    %cst_15 = arith.constant dense<0.000000e+00> : vector<16x128xf32>
    %12 = tpu.matmul %5, %11, %cst_15 {dimension_numbers = #tpu.dot_dimension_numbers<[1], [0], [0], [1], [0, 0, 1, 1], [], []>} : vector<16x16xf32>, vector<16x128xf32>, vector<16x128xf32> -> vector<16x128xf32>
    %c1 = arith.constant 1 : index
    %c0_16 = arith.constant 0 : index
    %c0_17 = arith.constant 0 : index
    %13 = vector.load %arg4[%c1, %c0_16, %c0_17] : memref<8x16x128xf32, #tpu.memory_space<vmem>>, vector<1x16x128xf32>
    %14 = vector.shape_cast %13 : vector<1x16x128xf32> to vector<16x128xf32>
    %15 = vector.shape_cast %12 : vector<16x128xf32> to vector<1x16x128xf32>
    tpu.vector_store %arg4[%c1, %c0_16, %c0_17], %15 {strides = array<i32>} : memref<8x16x128xf32, #tpu.memory_space<vmem>>, vector<1x16x128xf32>,
    %c32 = arith.constant 32 : index
    %c0_18 = arith.constant 0 : index
    %16 = vector.load %arg5[%c32, %c0_18] : memref<128x128xf32, #tpu.memory_space<vmem>>, vector<16x128xf32>
    %cst_19 = arith.constant dense<0.000000e+00> : vector<16x128xf32>
    %17 = tpu.matmul %5, %16, %cst_19 {dimension_numbers = #tpu.dot_dimension_numbers<[1], [0], [0], [1], [0, 0, 1, 1], [], []>} : vector<16x16xf32>, vector<16x128xf32>, vector<16x128xf32> -> vector<16x128xf32>
    %c2 = arith.constant 2 : index
    %c0_20 = arith.constant 0 : index
    %c0_21 = arith.constant 0 : index
    %18 = vector.load %arg4[%c2, %c0_20, %c0_21] : memref<8x16x128xf32, #tpu.memory_space<vmem>>, vector<1x16x128xf32>
    %19 = vector.shape_cast %18 : vector<1x16x128xf32> to vector<16x128xf32>
    %20 = vector.shape_cast %17 : vector<16x128xf32> to vector<1x16x128xf32>
    tpu.vector_store %arg4[%c2, %c0_20, %c0_21], %20 {strides = array<i32>} : memref<8x16x128xf32, #tpu.memory_space<vmem>>, vector<1x16x128xf32>,
    %c48 = arith.constant 48 : index
    %c0_22 = arith.constant 0 : index
    %21 = vector.load %arg5[%c48, %c0_22] : memref<128x128xf32, #tpu.memory_space<vmem>>, vector<16x128xf32>
    %cst_23 = arith.constant dense<0.000000e+00> : vector<16x128xf32>
    %22 = tpu.matmul %5, %21, %cst_23 {dimension_numbers = #tpu.dot_dimension_numbers<[1], [0], [0], [1], [0, 0, 1, 1], [], []>} : vector<16x16xf32>, vector<16x128xf32>, vector<16x128xf32> -> vector<16x128xf32>
    %c3 = arith.constant 3 : index
    %c0_24 = arith.constant 0 : index
    %c0_25 = arith.constant 0 : index
    %23 = vector.load %arg4[%c3, %c0_24, %c0_25] : memref<8x16x128xf32, #tpu.memory_space<vmem>>, vector<1x16x128xf32>
    %24 = vector.shape_cast %23 : vector<1x16x128xf32> to vector<16x128xf32>
    %25 = vector.shape_cast %22 : vector<16x128xf32> to vector<1x16x128xf32>
    tpu.vector_store %arg4[%c3, %c0_24, %c0_25], %25 {strides = array<i32>} : memref<8x16x128xf32, #tpu.memory_space<vmem>>, vector<1x16x128xf32>,
    %c64 = arith.constant 64 : index
    %c0_26 = arith.constant 0 : index
    %26 = vector.load %arg5[%c64, %c0_26] : memref<128x128xf32, #tpu.memory_space<vmem>>, vector<16x128xf32>
    %cst_27 = arith.constant dense<0.000000e+00> : vector<16x128xf32>
    %27 = tpu.matmul %5, %26, %cst_27 {dimension_numbers = #tpu.dot_dimension_numbers<[1], [0], [0], [1], [0, 0, 1, 1], [], []>} : vector<16x16xf32>, vector<16x128xf32>, vector<16x128xf32> -> vector<16x128xf32>
    %c4 = arith.constant 4 : index
    %c0_28 = arith.constant 0 : index
    %c0_29 = arith.constant 0 : index
    %28 = vector.load %arg4[%c4, %c0_28, %c0_29] : memref<8x16x128xf32, #tpu.memory_space<vmem>>, vector<1x16x128xf32>
    %29 = vector.shape_cast %28 : vector<1x16x128xf32> to vector<16x128xf32>
    %30 = vector.shape_cast %27 : vector<16x128xf32> to vector<1x16x128xf32>
    tpu.vector_store %arg4[%c4, %c0_28, %c0_29], %30 {strides = array<i32>} : memref<8x16x128xf32, #tpu.memory_space<vmem>>, vector<1x16x128xf32>,
    %c80 = arith.constant 80 : index
    %c0_30 = arith.constant 0 : index
    %31 = vector.load %arg5[%c80, %c0_30] : memref<128x128xf32, #tpu.memory_space<vmem>>, vector<16x128xf32>
    %cst_31 = arith.constant dense<0.000000e+00> : vector<16x128xf32>
    %32 = tpu.matmul %5, %31, %cst_31 {dimension_numbers = #tpu.dot_dimension_numbers<[1], [0], [0], [1], [0, 0, 1, 1], [], []>} : vector<16x16xf32>, vector<16x128xf32>, vector<16x128xf32> -> vector<16x128xf32>
    %c5 = arith.constant 5 : index
    %c0_32 = arith.constant 0 : index
    %c0_33 = arith.constant 0 : index
    %33 = vector.load %arg4[%c5, %c0_32, %c0_33] : memref<8x16x128xf32, #tpu.memory_space<vmem>>, vector<1x16x128xf32>
    %34 = vector.shape_cast %33 : vector<1x16x128xf32> to vector<16x128xf32>
    %35 = vector.shape_cast %32 : vector<16x128xf32> to vector<1x16x128xf32>
    tpu.vector_store %arg4[%c5, %c0_32, %c0_33], %35 {strides = array<i32>} : memref<8x16x128xf32, #tpu.memory_space<vmem>>, vector<1x16x128xf32>,
    %c96 = arith.constant 96 : index
    %c0_34 = arith.constant 0 : index
    %36 = vector.load %arg5[%c96, %c0_34] : memref<128x128xf32, #tpu.memory_space<vmem>>, vector<16x128xf32>
    %cst_35 = arith.constant dense<0.000000e+00> : vector<16x128xf32>
    %37 = tpu.matmul %5, %36, %cst_35 {dimension_numbers = #tpu.dot_dimension_numbers<[1], [0], [0], [1], [0, 0, 1, 1], [], []>} : vector<16x16xf32>, vector<16x128xf32>, vector<16x128xf32> -> vector<16x128xf32>
    %c6 = arith.constant 6 : index
    %c0_36 = arith.constant 0 : index
    %c0_37 = arith.constant 0 : index
    %38 = vector.load %arg4[%c6, %c0_36, %c0_37] : memref<8x16x128xf32, #tpu.memory_space<vmem>>, vector<1x16x128xf32>
    %39 = vector.shape_cast %38 : vector<1x16x128xf32> to vector<16x128xf32>
    %40 = vector.shape_cast %37 : vector<16x128xf32> to vector<1x16x128xf32>
    tpu.vector_store %arg4[%c6, %c0_36, %c0_37], %40 {strides = array<i32>} : memref<8x16x128xf32, #tpu.memory_space<vmem>>, vector<1x16x128xf32>,
    %c112 = arith.constant 112 : index
    %c0_38 = arith.constant 0 : index
    %41 = vector.load %arg5[%c112, %c0_38] : memref<128x128xf32, #tpu.memory_space<vmem>>, vector<16x128xf32>
    %cst_39 = arith.constant dense<0.000000e+00> : vector<16x128xf32>
    %42 = tpu.matmul %5, %41, %cst_39 {dimension_numbers = #tpu.dot_dimension_numbers<[1], [0], [0], [1], [0, 0, 1, 1], [], []>} : vector<16x16xf32>, vector<16x128xf32>, vector<16x128xf32> -> vector<16x128xf32>
    %c7 = arith.constant 7 : index
    %c0_40 = arith.constant 0 : index
    %c0_41 = arith.constant 0 : index
    %43 = vector.load %arg4[%c7, %c0_40, %c0_41] : memref<8x16x128xf32, #tpu.memory_space<vmem>>, vector<1x16x128xf32>
    %44 = vector.shape_cast %43 : vector<1x16x128xf32> to vector<16x128xf32>
    %45 = vector.shape_cast %42 : vector<16x128xf32> to vector<1x16x128xf32>
    tpu.vector_store %arg4[%c7, %c0_40, %c0_41], %45 {strides = array<i32>} : memref<8x16x128xf32, #tpu.memory_space<vmem>>, vector<1x16x128xf32>,
    return
  }
  func.func @transform_0(%arg0: i32) -> (i32, i32) {
    %c0_i32 = arith.constant 0 : i32
    %c0_i32_0 = arith.constant 0 : i32
    %c0_i32_1 = arith.constant 0 : i32
    return %c0_i32, %c0_i32_0 : i32, i32
  }
  func.func @transform_1(%arg0: i32) -> (i32, i32) {
    %c0_i32 = arith.constant 0 : i32
    %c0_i32_0 = arith.constant 0 : i32
    %c0_i32_1 = arith.constant 0 : i32
    return %c0_i32, %c0_i32_0 : i32, i32
  }
  func.func @transform_2(%arg0: i32) -> (i32, i32, i32) {
    %c0_i32 = arith.constant 0 : i32
    %c0_i32_0 = arith.constant 0 : i32
    %c0_i32_1 = arith.constant 0 : i32
    return %arg0, %c0_i32, %c0_i32_0 : i32, i32, i32
  }
  func.func @transform_3(%arg0: i32) -> (i32, i32, i32) {
    %c0_i32 = arith.constant 0 : i32
    %c0_i32_0 = arith.constant 0 : i32
    %c0_i32_1 = arith.constant 0 : i32
    return %arg0, %c0_i32, %c0_i32_0 : i32, i32, i32
  }
}

</mosaic_0001>

<llo_original>
// kernel: tpu_custom_call.1
$region0: #{tpu_custom_call.1}
  #allocation0 [shape = 'u32[]', space=smem, size = 0x4, offset = 0x4, fixed_abs, tag = 'smem constant byte address 0x4 - core index']
  #allocation1 [shape = 'u32[144,128]{1,0:T(1,128)}', space=vmem, size = 0x12000, scoped, tag = 'internal scratch']
  #allocation2 [shape = 'f32[128,128]{1,0:T(8,128)}', space=vmem, size = 0x10000, scoped, tag = 'scratch operand']
  %s0 = inlined_call_operand.hbm [shape: f32[16,16], index: 0, kind: input, shape index: {}]
  %s1 = inlined_call_operand.hbm [shape: f32[16,128], index: 1, kind: input, shape index: {}]
  %s2 = inlined_call_operand.hbm [shape: f32[8,16,16], index: 2, kind: input, shape index: {}]
  %s3 = inlined_call_operand.hbm [shape: f32[8,16,128], index: 3, kind: output, shape index: {}]
  %s4 = sld [smem:[#allocation0]]
  $region34: #{tpu_custom_call.1} parent=0
    _
  %s6 = ssub.s32 1, %s4
  %s7 = scalar_select 0, %s6, %s4
  $region1: #{tpu_custom_call.1} parent=0
    #allocation3 [shape = 'u8[8192]{0}', space=vmem, size = 0x2000, scoped, tag = 'input window, operand 0, single buffered']
    #allocation4 [shape = 's32[1]{0}', space=sflag, size = 0x4, scoped, tag = 'scoped memory for tpu_custom_call.1']
    #allocation5 [shape = 's32[1]{0}', space=sflag, size = 0x4, scoped, tag = 'scoped memory for tpu_custom_call.1']
    #allocation6 [shape = 'u8[8192]{0}', space=vmem, size = 0x2000, scoped, tag = 'input window, operand 1, single buffered']
    #allocation7 [shape = 's32[1]{0}', space=sflag, size = 0x4, scoped, tag = 'scoped memory for tpu_custom_call.1']
    #allocation8 [shape = 'u8[65536]{0}', space=vmem, size = 0x10000, scoped, tag = 'input window, operand 2, single buffered']
    #allocation9 [shape = 'u8[65536]{0}', space=vmem, size = 0x10000, scoped, tag = 'output window, operand 0, single buffered']
    %8 = vsyncpa [#allocation4], 0
    %9 = vsyncpa [#allocation7], 0
    %10 = vsyncpa [#allocation5], 0
    // Predicated region
    $region2: #{tpu_custom_call.1} parent=1 // pred_check
      _
    $region3: #{tpu_custom_call.1} parent=1 // pred_check_branch
      %12 = sbr.rel (0) target = $region5
    $region4: #{tpu_custom_call.1} parent=1 // pred_region
      %s14 = ssub.s32 256, 256
      %15 = vsyncadd [#allocation4], %s14
      %s16 = sshll.u32 [#allocation3], 4
      %s17 = int_to_ptr.vmem [resolvable:$true] %s16
      %22 = dma.hbm_to_vmem [thread:$0]  %s0, 256, %s17, [#allocation4], 128, 128, 8
    $region5: #{tpu_custom_call.1} parent=1 // pred_fallthru
      _
    // Predicated region
    $region6: #{tpu_custom_call.1} parent=1 // pred_check
      _
    $region7: #{tpu_custom_call.1} parent=1 // pred_check_branch
      %24 = sbr.rel (0) target = $region9
    $region8: #{tpu_custom_call.1} parent=1 // pred_region
      %s26 = ssub.s32 256, 256
      %27 = vsyncadd [#allocation7], %s26
      %s28 = sshll.u32 [#allocation6], 4
      %s29 = int_to_ptr.vmem [resolvable:$true] %s28
      %34 = dma.hbm_to_vmem [thread:$0]  %s1, 256, %s29, [#allocation7], 128, 128, 8
    $region9: #{tpu_custom_call.1} parent=1 // pred_fallthru
      _
    // Predicated region
    $region10: #{tpu_custom_call.1} parent=1 // pred_check
      _
    $region11: #{tpu_custom_call.1} parent=1 // pred_check_branch
      %36 = sbr.rel (0) target = $region13
    $region12: #{tpu_custom_call.1} parent=1 // pred_region
      %s38 = ssub.s32 2048, 2048
      %39 = vsyncadd [#allocation7], %s38
      %s40 = sshll.u32 [#allocation8], 4
      %s41 = int_to_ptr.vmem [resolvable:$true] %s40
      %46 = dma.hbm_to_vmem [thread:$0]  %s2, 2048, %s41, [#allocation7], 128, 128, 8
    $region13: #{tpu_custom_call.1} parent=1 // pred_fallthru
      _
    // Predicated region
    $region14: #{tpu_custom_call.1} parent=1 // pred_check
      _
    $region15: #{tpu_custom_call.1} parent=1 // pred_check_branch
      %48 = sbr.rel (0) target = $region17
    $region16: #{tpu_custom_call.1} parent=1 // pred_region
      %49 = dma.done [#allocation4], 256
    $region17: #{tpu_custom_call.1} parent=1 // pred_fallthru
      _
    // Predicated region
    $region18: #{tpu_custom_call.1} parent=1 // pred_check
      _
    $region19: #{tpu_custom_call.1} parent=1 // pred_check_branch
      %51 = sbr.rel (0) target = $region21
    $region20: #{tpu_custom_call.1} parent=1 // pred_region
      %52 = dma.done [#allocation7], 256
    $region21: #{tpu_custom_call.1} parent=1 // pred_fallthru
      _
    // Predicated region
    $region22: #{tpu_custom_call.1} parent=1 // pred_check
      _
    $region23: #{tpu_custom_call.1} parent=1 // pred_check_branch
      %54 = sbr.rel (0) target = $region25
    $region24: #{tpu_custom_call.1} parent=1 // pred_region
      %55 = dma.done [#allocation7], 2048
    $region25: #{tpu_custom_call.1} parent=1 // pred_fallthru
      _
    %v56 = vld [vmem:[#allocation8] sm:$0xff]
    %v57 = vld [vmem:[#allocation8 + $0x8] sm:$0xff]
    %v58 = vld [vmem:[#allocation8 + $0x10] sm:$0xff]
    %v59 = vld [vmem:[#allocation8 + $0x18] sm:$0xff]
    %v60 = vld [vmem:[#allocation8 + $0x20] sm:$0xff]
    %v61 = vld [vmem:[#allocation8 + $0x28] sm:$0xff]
    %v62 = vld [vmem:[#allocation8 + $0x30] sm:$0xff]
    %v63 = vld [vmem:[#allocation8 + $0x38] sm:$0xff]
    %v64 = vld [vmem:[#allocation8 + $0x40] sm:$0xff]
    %v65 = vld [vmem:[#allocation8 + $0x48] sm:$0xff]
    %v66 = vld [vmem:[#allocation8 + $0x50] sm:$0xff]
    %v67 = vld [vmem:[#allocation8 + $0x58] sm:$0xff]
    %v68 = vld [vmem:[#allocation8 + $0x60] sm:$0xff]
    %v69 = vld [vmem:[#allocation8 + $0x68] sm:$0xff]
    %v70 = vld [vmem:[#allocation8 + $0x70] sm:$0xff]
    %v71 = vld [vmem:[#allocation8 + $0x78] sm:$0xff]
    %v72 = vld [vmem:[#allocation6] sm:$0xff]
    %v73 = vld [vmem:[#allocation6 + $0x8] sm:$0xff]
    %vm74 = vcmask 130048
    %v76 = vsel %vm74, %v56, 0
    %v79 = vsel %vm74, %v57, 0
    %v82 = vsel %vm74, %v58, 0
    %v85 = vsel %vm74, %v59, 0
    %v88 = vsel %vm74, %v60, 0
    %v91 = vsel %vm74, %v61, 0
    %v94 = vsel %vm74, %v62, 0
    %v97 = vsel %vm74, %v63, 0
    %v100 = vsel %vm74, %v64, 0
    %v103 = vsel %vm74, %v65, 0
    %v106 = vsel %vm74, %v66, 0
    %v109 = vsel %vm74, %v67, 0
    %v112 = vsel %vm74, %v68, 0
    %v115 = vsel %vm74, %v69, 0
    %v118 = vsel %vm74, %v70, 0
    %v121 = vsel %vm74, %v71, 0
    %123 = vmatprep.subr.mxu0 0.0
    %124 = vmatpush1.msra.mxu0 %v72
    %125 = vmatprep.subr.mxu0 0.0
    %126 = vmatpush1.msra.mxu0 %v73
    %127 = vmatprep.subr.mxu0 0.0
    %128 = vmatpush1.msra.mxu0 0.0
    %129 = vmatprep.subr.mxu0 0.0
    %130 = vmatpush1.msra.mxu0 0.0
    %131 = vmatprep.subr.mxu0 0.0
    %132 = vmatpush1.msra.mxu0 0.0
    %133 = vmatprep.subr.mxu0 0.0
    %134 = vmatpush1.msra.mxu0 0.0
    %135 = vmatprep.subr.mxu0 0.0
    %136 = vmatpush1.msra.mxu0 0.0
    %137 = vmatprep.subr.mxu0 0.0
    %138 = vmatpush1.msra.mxu0 0.0
    %139 = vmatprep.subr.mxu0 0.0
    %140 = vmatpush1.msra.mxu0 0.0
    %141 = vmatprep.subr.mxu0 0.0
    %142 = vmatpush1.msra.mxu0 0.0
    %143 = vmatprep.subr.mxu0 0.0
    %144 = vmatpush1.msra.mxu0 0.0
    %145 = vmatprep.subr.mxu0 0.0
    %146 = vmatpush1.msra.mxu0 0.0
    %147 = vmatprep.subr.mxu0 0.0
    %148 = vmatpush1.msra.mxu0 0.0
    %149 = vmatprep.subr.mxu0 0.0
    %150 = vmatpush1.msra.mxu0 0.0
    %151 = vmatprep.subr.mxu0 0.0
    %152 = vmatpush1.msra.mxu0 0.0
    %153 = vmatprep.subr.mxu0 0.0
    %154 = vmatpush1.msra.mxu0 0.0
    %155 = vmatprep.subr.mxu0 0.0
    %156 = vmatpush1.msra.mxu0 0.0
    %157 = vmatprep.subr.mxu0 0.0
    %158 = vmatpush1.msra.mxu0 0.0
    %159 = vmatprep.subr.mxu0 0.0
    %160 = vmatpush1.msra.mxu0 0.0
    %161 = vmatprep.subr.mxu0 0.0
    %162 = vmatpush1.msra.mxu0 0.0
    %163 = vmatprep.subr.mxu0 0.0
    %164 = vmatpush1.msra.mxu0 0.0
    %165 = vmatprep.subr.mxu0 0.0
    %166 = vmatpush1.msra.mxu0 0.0
    %167 = vmatprep.subr.mxu0 0.0
    %168 = vmatpush1.msra.mxu0 0.0
    %169 = vmatprep.subr.mxu0 0.0
    %170 = vmatpush1.msra.mxu0 0.0
    %171 = vmatprep.subr.mxu0 0.0
    %172 = vmatpush1.msra.mxu0 0.0
    %173 = vmatprep.subr.mxu0 0.0
    %174 = vmatpush1.msra.mxu0 0.0
    %175 = vmatprep.subr.mxu0 0.0
    %176 = vmatpush1.msra.mxu0 0.0
    %177 = vmatprep.subr.mxu0 0.0
    %178 = vmatpush1.msra.mxu0 0.0
    %179 = vmatprep.subr.mxu0 0.0
    %180 = vmatpush1.msra.mxu0 0.0
    %181 = vmatprep.subr.mxu0 0.0
    %182 = vmatpush1.msra.mxu0 0.0
    %183 = vmatprep.subr.mxu0 0.0
    %184 = vmatpush1.msra.mxu0 0.0
    %185 = vmatprep.subr.mxu0 0.0
    %186 = vmatpush1.msra.mxu0 0.0
    %187 = vmatprep.mubr.f32.mxu0 0.0
    %188 = vmatmul.mubr.f32.gmra.mrb[0].mxu0 %v76
    %v189 = vpop.f32.mrb[0].mxu0
    %v190 = vadd.f32 0.0, %v189
    %v191 = vpop.f32.mrb[0].mxu0
    %192 = vmatprep.mubr.f32.mxu0 0.0
    %193 = vmatmul.mubr.f32.gmra.mrb[0].mxu0 %v79
    %v194 = vpop.f32.mrb[0].mxu0
    %v195 = vadd.f32 0.0, %v194
    %v196 = vpop.f32.mrb[0].mxu0
    %197 = vmatprep.mubr.f32.mxu0 0.0
    %198 = vmatmul.mubr.f32.gmra.mrb[0].mxu0 %v82
    %v199 = vpop.f32.mrb[0].mxu0
    %v200 = vadd.f32 0.0, %v199
    %v201 = vpop.f32.mrb[0].mxu0
    %202 = vmatprep.mubr.f32.mxu0 0.0
    %203 = vmatmul.mubr.f32.gmra.mrb[0].mxu0 %v85
    %v204 = vpop.f32.mrb[0].mxu0
    %v205 = vadd.f32 0.0, %v204
    %v206 = vpop.f32.mrb[0].mxu0
    %207 = vmatprep.mubr.f32.mxu0 0.0
    %208 = vmatmul.mubr.f32.gmra.mrb[0].mxu0 %v88
    %v209 = vpop.f32.mrb[0].mxu0
    %v210 = vadd.f32 0.0, %v209
    %v211 = vpop.f32.mrb[0].mxu0
    %212 = vmatprep.mubr.f32.mxu0 0.0
    %213 = vmatmul.mubr.f32.gmra.mrb[0].mxu0 %v91
    %v214 = vpop.f32.mrb[0].mxu0
    %v215 = vadd.f32 0.0, %v214
    %v216 = vpop.f32.mrb[0].mxu0
    %217 = vmatprep.mubr.f32.mxu0 0.0
    %218 = vmatmul.mubr.f32.gmra.mrb[0].mxu0 %v94
    %v219 = vpop.f32.mrb[0].mxu0
    %v220 = vadd.f32 0.0, %v219
    %v221 = vpop.f32.mrb[0].mxu0
    %222 = vmatprep.mubr.f32.mxu0 0.0
    %223 = vmatmul.mubr.f32.gmra.mrb[0].mxu0 %v97
    %v224 = vpop.f32.mrb[0].mxu0
    %v225 = vadd.f32 0.0, %v224
    %v226 = vpop.f32.mrb[0].mxu0
    %227 = vmatprep.mubr.f32.mxu0 0.0
    %228 = vmatmul.mubr.f32.gmra.mrb[0].mxu0 %v100
    %v229 = vpop.f32.mrb[0].mxu0
    %v230 = vadd.f32 0.0, %v229
    %v231 = vpop.f32.mrb[0].mxu0
    %232 = vmatprep.mubr.f32.mxu0 0.0
    %233 = vmatmul.mubr.f32.gmra.mrb[0].mxu0 %v103
    %v234 = vpop.f32.mrb[0].mxu0
    %v235 = vadd.f32 0.0, %v234
    %v236 = vpop.f32.mrb[0].mxu0
    %237 = vmatprep.mubr.f32.mxu0 0.0
    %238 = vmatmul.mubr.f32.gmra.mrb[0].mxu0 %v106
    %v239 = vpop.f32.mrb[0].mxu0
    %v240 = vadd.f32 0.0, %v239
    %v241 = vpop.f32.mrb[0].mxu0
    %242 = vmatprep.mubr.f32.mxu0 0.0
    %243 = vmatmul.mubr.f32.gmra.mrb[0].mxu0 %v109
    %v244 = vpop.f32.mrb[0].mxu0
    %v245 = vadd.f32 0.0, %v244
    %v246 = vpop.f32.mrb[0].mxu0
    %247 = vmatprep.mubr.f32.mxu0 0.0
    %248 = vmatmul.mubr.f32.gmra.mrb[0].mxu0 %v112
    %v249 = vpop.f32.mrb[0].mxu0
    %v250 = vadd.f32 0.0, %v249
    %v251 = vpop.f32.mrb[0].mxu0
    %252 = vmatprep.mubr.f32.mxu0 0.0
    %253 = vmatmul.mubr.f32.gmra.mrb[0].mxu0 %v115
    %v254 = vpop.f32.mrb[0].mxu0
    %v255 = vadd.f32 0.0, %v254
    %v256 = vpop.f32.mrb[0].mxu0
    %257 = vmatprep.mubr.f32.mxu0 0.0
    %258 = vmatmul.mubr.f32.gmra.mrb[0].mxu0 %v118
    %v259 = vpop.f32.mrb[0].mxu0
    %v260 = vadd.f32 0.0, %v259
    %v261 = vpop.f32.mrb[0].mxu0
    %262 = vmatprep.mubr.f32.mxu0 0.0
    %263 = vmatmul.mubr.f32.gmra.mrb[0].mxu0 %v121
    %v264 = vpop.f32.mrb[0].mxu0
    %v265 = vadd.f32 0.0, %v264
    %v266 = vpop.f32.mrb[0].mxu0
    %267 = vdwg.mxu0
    %268 = vst [vmem:[#allocation2] sm:$0xff] %v190
    %269 = vst [vmem:[#allocation2 + $0x8] sm:$0xff] %v195
    %270 = vst [vmem:[#allocation2 + $0x10] sm:$0xff] %v200
    %271 = vst [vmem:[#allocation2 + $0x18] sm:$0xff] %v205
    %272 = vst [vmem:[#allocation2 + $0x20] sm:$0xff] %v210
    %273 = vst [vmem:[#allocation2 + $0x28] sm:$0xff] %v215
    %274 = vst [vmem:[#allocation2 + $0x30] sm:$0xff] %v220
    %275 = vst [vmem:[#allocation2 + $0x38] sm:$0xff] %v225
    %276 = vst [vmem:[#allocation2 + $0x40] sm:$0xff] %v230
    %277 = vst [vmem:[#allocation2 + $0x48] sm:$0xff] %v235
    %278 = vst [vmem:[#allocation2 + $0x50] sm:$0xff] %v240
    %279 = vst [vmem:[#allocation2 + $0x58] sm:$0xff] %v245
    %280 = vst [vmem:[#allocation2 + $0x60] sm:$0xff] %v250
    %281 = vst [vmem:[#allocation2 + $0x68] sm:$0xff] %v255
    %282 = vst [vmem:[#allocation2 + $0x70] sm:$0xff] %v260
    %283 = vst [vmem:[#allocation2 + $0x78] sm:$0xff] %v265
    %v284 = vld [vmem:[#allocation3] sm:$0xff]
    %v285 = vld [vmem:[#allocation3 + $0x8] sm:$0xff]
    %v286 = vld [vmem:[#allocation2] sm:$0xff]
    %v287 = vld [vmem:[#allocation2 + $0x8] sm:$0xff]
    %v289 = vsel %vm74, %v284, 0
    %v292 = vsel %vm74, %v285, 0
    %294 = vmatprep.subr.mxu0 0.0
    %295 = vmatpush1.msra.mxu0 %v286
    %296 = vmatprep.subr.mxu0 0.0
    %297 = vmatpush1.msra.mxu0 %v287
    %298 = vmatprep.subr.mxu0 0.0
    %299 = vmatpush1.msra.mxu0 0.0
    %300 = vmatprep.subr.mxu0 0.0
    %301 = vmatpush1.msra.mxu0 0.0
    %302 = vmatprep.subr.mxu0 0.0
    %303 = vmatpush1.msra.mxu0 0.0
    %304 = vmatprep.subr.mxu0 0.0
    %305 = vmatpush1.msra.mxu0 0.0
    %306 = vmatprep.subr.mxu0 0.0
    %307 = vmatpush1.msra.mxu0 0.0
    %308 = vmatprep.subr.mxu0 0.0
    %309 = vmatpush1.msra.mxu0 0.0
    %310 = vmatprep.subr.mxu0 0.0
    %311 = vmatpush1.msra.mxu0 0.0
    %312 = vmatprep.subr.mxu0 0.0
    %313 = vmatpush1.msra.mxu0 0.0
    %314 = vmatprep.subr.mxu0 0.0
    %315 = vmatpush1.msra.mxu0 0.0
    %316 = vmatprep.subr.mxu0 0.0
    %317 = vmatpush1.msra.mxu0 0.0
    %318 = vmatprep.subr.mxu0 0.0
    %319 = vmatpush1.msra.mxu0 0.0
    %320 = vmatprep.subr.mxu0 0.0
    %321 = vmatpush1.msra.mxu0 0.0
    %322 = vmatprep.subr.mxu0 0.0
    %323 = vmatpush1.msra.mxu0 0.0
    %324 = vmatprep.subr.mxu0 0.0
    %325 = vmatpush1.msra.mxu0 0.0
    %326 = vmatprep.subr.mxu0 0.0
    %327 = vmatpush1.msra.mxu0 0.0
    %328 = vmatprep.subr.mxu0 0.0
    %329 = vmatpush1.msra.mxu0 0.0
    %330 = vmatprep.subr.mxu0 0.0
    %331 = vmatpush1.msra.mxu0 0.0
    %332 = vmatprep.subr.mxu0 0.0
    %333 = vmatpush1.msra.mxu0 0.0
    %334 = vmatprep.subr.mxu0 0.0
    %335 = vmatpush1.msra.mxu0 0.0
    %336 = vmatprep.subr.mxu0 0.0
    %337 = vmatpush1.msra.mxu0 0.0
    %338 = vmatprep.subr.mxu0 0.0
    %339 = vmatpush1.msra.mxu0 0.0
    %340 = vmatprep.subr.mxu0 0.0
    %341 = vmatpush1.msra.mxu0 0.0
    %342 = vmatprep.subr.mxu0 0.0
    %343 = vmatpush1.msra.mxu0 0.0
    %344 = vmatprep.subr.mxu0 0.0
    %345 = vmatpush1.msra.mxu0 0.0
    %346 = vmatprep.subr.mxu0 0.0
    %347 = vmatpush1.msra.mxu0 0.0
    %348 = vmatprep.subr.mxu0 0.0
    %349 = vmatpush1.msra.mxu0 0.0
    %350 = vmatprep.subr.mxu0 0.0
    %351 = vmatpush1.msra.mxu0 0.0
    %352 = vmatprep.subr.mxu0 0.0
    %353 = vmatpush1.msra.mxu0 0.0
    %354 = vmatprep.subr.mxu0 0.0
    %355 = vmatpush1.msra.mxu0 0.0
    %356 = vmatprep.subr.mxu0 0.0
    %357 = vmatpush1.msra.mxu0 0.0
    %358 = vmatprep.mubr.f32.mxu0 0.0
    %359 = vmatmul.mubr.f32.gmra.mrb[0].mxu0 %v289
    %v360 = vpop.f32.mrb[0].mxu0
    %v361 = vadd.f32 0.0, %v360
    %v362 = vpop.f32.mrb[0].mxu0
    %363 = vmatprep.mubr.f32.mxu0 0.0
    %364 = vmatmul.mubr.f32.gmra.mrb[0].mxu0 %v292
    %v365 = vpop.f32.mrb[0].mxu0
    %v366 = vadd.f32 0.0, %v365
    %v367 = vpop.f32.mrb[0].mxu0
    %368 = vdwg.mxu0
    %369 = vst [vmem:[#allocation9] sm:$0xff] %v361
    %370 = vst [vmem:[#allocation9 + $0x8] sm:$0xff] %v366
    %v371 = vld [vmem:[#allocation2 + $0x10] sm:$0xff]
    %v372 = vld [vmem:[#allocation2 + $0x18] sm:$0xff]
    %373 = vmatprep.subr.mxu0 0.0
    %374 = vmatpush1.msra.mxu0 %v371
    %375 = vmatprep.subr.mxu0 0.0
    %376 = vmatpush1.msra.mxu0 %v372
    %377 = vmatprep.subr.mxu0 0.0
    %378 = vmatpush1.msra.mxu0 0.0
    %379 = vmatprep.subr.mxu0 0.0
    %380 = vmatpush1.msra.mxu0 0.0
    %381 = vmatprep.subr.mxu0 0.0
    %382 = vmatpush1.msra.mxu0 0.0
    %383 = vmatprep.subr.mxu0 0.0
    %384 = vmatpush1.msra.mxu0 0.0
    %385 = vmatprep.subr.mxu0 0.0
    %386 = vmatpush1.msra.mxu0 0.0
    %387 = vmatprep.subr.mxu0 0.0
    %388 = vmatpush1.msra.mxu0 0.0
    %389 = vmatprep.subr.mxu0 0.0
    %390 = vmatpush1.msra.mxu0 0.0
    %391 = vmatprep.subr.mxu0 0.0
    %392 = vmatpush1.msra.mxu0 0.0
    %393 = vmatprep.subr.mxu0 0.0
    %394 = vmatpush1.msra.mxu0 0.0
    %395 = vmatprep.subr.mxu0 0.0
    %396 = vmatpush1.msra.mxu0 0.0
    %397 = vmatprep.subr.mxu0 0.0
    %398 = vmatpush1.msra.mxu0 0.0
    %399 = vmatprep.subr.mxu0 0.0
    %400 = vmatpush1.msra.mxu0 0.0
    %401 = vmatprep.subr.mxu0 0.0
    %402 = vmatpush1.msra.mxu0 0.0
    %403 = vmatprep.subr.mxu0 0.0
    %404 = vmatpush1.msra.mxu0 0.0
    %405 = vmatprep.subr.mxu0 0.0
    %406 = vmatpush1.msra.mxu0 0.0
    %407 = vmatprep.subr.mxu0 0.0
    %408 = vmatpush1.msra.mxu0 0.0
    %409 = vmatprep.subr.mxu0 0.0
    %410 = vmatpush1.msra.mxu0 0.0
    %411 = vmatprep.subr.mxu0 0.0
    %412 = vmatpush1.msra.mxu0 0.0
    %413 = vmatprep.subr.mxu0 0.0
    %414 = vmatpush1.msra.mxu0 0.0
    %415 = vmatprep.subr.mxu0 0.0
    %416 = vmatpush1.msra.mxu0 0.0
    %417 = vmatprep.subr.mxu0 0.0
    %418 = vmatpush1.msra.mxu0 0.0
    %419 = vmatprep.subr.mxu0 0.0
    %420 = vmatpush1.msra.mxu0 0.0
    %421 = vmatprep.subr.mxu0 0.0
    %422 = vmatpush1.msra.mxu0 0.0
    %423 = vmatprep.subr.mxu0 0.0
    %424 = vmatpush1.msra.mxu0 0.0
    %425 = vmatprep.subr.mxu0 0.0
    %426 = vmatpush1.msra.mxu0 0.0
    %427 = vmatprep.subr.mxu0 0.0
    %428 = vmatpush1.msra.mxu0 0.0
    %429 = vmatprep.subr.mxu0 0.0
    %430 = vmatpush1.msra.mxu0 0.0
    %431 = vmatprep.subr.mxu0 0.0
    %432 = vmatpush1.msra.mxu0 0.0
    %433 = vmatprep.subr.mxu0 0.0
    %434 = vmatpush1.msra.mxu0 0.0
    %435 = vmatprep.subr.mxu0 0.0
    %436 = vmatpush1.msra.mxu0 0.0
    %437 = vmatprep.mubr.f32.mxu0 0.0
    %438 = vmatmul.mubr.f32.gmra.mrb[0].mxu0 %v289
    %v439 = vpop.f32.mrb[0].mxu0
    %v440 = vadd.f32 0.0, %v439
    %v441 = vpop.f32.mrb[0].mxu0
    %442 = vmatprep.mubr.f32.mxu0 0.0
    %443 = vmatmul.mubr.f32.gmra.mrb[0].mxu0 %v292
    %v444 = vpop.f32.mrb[0].mxu0
    %v445 = vadd.f32 0.0, %v444
    %v446 = vpop.f32.mrb[0].mxu0
    %447 = vdwg.mxu0
    %s448 = scalar_lea.vmem [#allocation9], 16
    %449 = vst [vmem:[%s448] sm:$0xff] %v440
    %450 = vst [vmem:[%s448 + $0x8] sm:$0xff] %v445
    %v451 = vld [vmem:[#allocation2 + $0x20] sm:$0xff]
    %v452 = vld [vmem:[#allocation2 + $0x28] sm:$0xff]
    %453 = vmatprep.subr.mxu0 0.0
    %454 = vmatpush1.msra.mxu0 %v451
    %455 = vmatprep.subr.mxu0 0.0
    %456 = vmatpush1.msra.mxu0 %v452
    %457 = vmatprep.subr.mxu0 0.0
    %458 = vmatpush1.msra.mxu0 0.0
    %459 = vmatprep.subr.mxu0 0.0
    %460 = vmatpush1.msra.mxu0 0.0
    %461 = vmatprep.subr.mxu0 0.0
    %462 = vmatpush1.msra.mxu0 0.0
    %463 = vmatprep.subr.mxu0 0.0
    %464 = vmatpush1.msra.mxu0 0.0
    %465 = vmatprep.subr.mxu0 0.0
    %466 = vmatpush1.msra.mxu0 0.0
    %467 = vmatprep.subr.mxu0 0.0
    %468 = vmatpush1.msra.mxu0 0.0
    %469 = vmatprep.subr.mxu0 0.0
    %470 = vmatpush1.msra.mxu0 0.0
    %471 = vmatprep.subr.mxu0 0.0
    %472 = vmatpush1.msra.mxu0 0.0
    %473 = vmatprep.subr.mxu0 0.0
    %474 = vmatpush1.msra.mxu0 0.0
    %475 = vmatprep.subr.mxu0 0.0
    %476 = vmatpush1.msra.mxu0 0.0
    %477 = vmatprep.subr.mxu0 0.0
    %478 = vmatpush1.msra.mxu0 0.0
    %479 = vmatprep.subr.mxu0 0.0
    %480 = vmatpush1.msra.mxu0 0.0
    %481 = vmatprep.subr.mxu0 0.0
    %482 = vmatpush1.msra.mxu0 0.0
    %483 = vmatprep.subr.mxu0 0.0
    %484 = vmatpush1.msra.mxu0 0.0
    %485 = vmatprep.subr.mxu0 0.0
    %486 = vmatpush1.msra.mxu0 0.0
    %487 = vmatprep.subr.mxu0 0.0
    %488 = vmatpush1.msra.mxu0 0.0
    %489 = vmatprep.subr.mxu0 0.0
    %490 = vmatpush1.msra.mxu0 0.0
    %491 = vmatprep.subr.mxu0 0.0
    %492 = vmatpush1.msra.mxu0 0.0
    %493 = vmatprep.subr.mxu0 0.0
    %494 = vmatpush1.msra.mxu0 0.0
    %495 = vmatprep.subr.mxu0 0.0
    %496 = vmatpush1.msra.mxu0 0.0
    %497 = vmatprep.subr.mxu0 0.0
    %498 = vmatpush1.msra.mxu0 0.0
    %499 = vmatprep.subr.mxu0 0.0
    %500 = vmatpush1.msra.mxu0 0.0
    %501 = vmatprep.subr.mxu0 0.0
    %502 = vmatpush1.msra.mxu0 0.0
    %503 = vmatprep.subr.mxu0 0.0
    %504 = vmatpush1.msra.mxu0 0.0
    %505 = vmatprep.subr.mxu0 0.0
    %506 = vmatpush1.msra.mxu0 0.0
    %507 = vmatprep.subr.mxu0 0.0
    %508 = vmatpush1.msra.mxu0 0.0
    %509 = vmatprep.subr.mxu0 0.0
    %510 = vmatpush1.msra.mxu0 0.0
    %511 = vmatprep.subr.mxu0 0.0
    %512 = vmatpush1.msra.mxu0 0.0
    %513 = vmatprep.subr.mxu0 0.0
    %514 = vmatpush1.msra.mxu0 0.0
    %515 = vmatprep.subr.mxu0 0.0
    %516 = vmatpush1.msra.mxu0 0.0
    %517 = vmatprep.mubr.f32.mxu0 0.0
    %518 = vmatmul.mubr.f32.gmra.mrb[0].mxu0 %v289
    %v519 = vpop.f32.mrb[0].mxu0
    %v520 = vadd.f32 0.0, %v519
    %v521 = vpop.f32.mrb[0].mxu0
    %522 = vmatprep.mubr.f32.mxu0 0.0
    %523 = vmatmul.mubr.f32.gmra.mrb[0].mxu0 %v292
    %v524 = vpop.f32.mrb[0].mxu0
    %v525 = vadd.f32 0.0, %v524
    %v526 = vpop.f32.mrb[0].mxu0
    %527 = vdwg.mxu0
    %s528 = scalar_lea.vmem [#allocation9], 32
    %529 = vst [vmem:[%s528] sm:$0xff] %v520
    %530 = vst [vmem:[%s528 + $0x8] sm:$0xff] %v525
    %v531 = vld [vmem:[#allocation2 + $0x30] sm:$0xff]
    %v532 = vld [vmem:[#allocation2 + $0x38] sm:$0xff]
    %533 = vmatprep.subr.mxu0 0.0
    %534 = vmatpush1.msra.mxu0 %v531
    %535 = vmatprep.subr.mxu0 0.0
    %536 = vmatpush1.msra.mxu0 %v532
    %537 = vmatprep.subr.mxu0 0.0
    %538 = vmatpush1.msra.mxu0 0.0
    %539 = vmatprep.subr.mxu0 0.0
    %540 = vmatpush1.msra.mxu0 0.0
    %541 = vmatprep.subr.mxu0 0.0
    %542 = vmatpush1.msra.mxu0 0.0
    %543 = vmatprep.subr.mxu0 0.0
    %544 = vmatpush1.msra.mxu0 0.0
    %545 = vmatprep.subr.mxu0 0.0
    %546 = vmatpush1.msra.mxu0 0.0
    %547 = vmatprep.subr.mxu0 0.0
    %548 = vmatpush1.msra.mxu0 0.0
    %549 = vmatprep.subr.mxu0 0.0
    %550 = vmatpush1.msra.mxu0 0.0
    %551 = vmatprep.subr.mxu0 0.0
    %552 = vmatpush1.msra.mxu0 0.0
    %553 = vmatprep.subr.mxu0 0.0
    %554 = vmatpush1.msra.mxu0 0.0
    %555 = vmatprep.subr.mxu0 0.0
    %556 = vmatpush1.msra.mxu0 0.0
    %557 = vmatprep.subr.mxu0 0.0
    %558 = vmatpush1.msra.mxu0 0.0
    %559 = vmatprep.subr.mxu0 0.0
    %560 = vmatpush1.msra.mxu0 0.0
    %561 = vmatprep.subr.mxu0 0.0
    %562 = vmatpush1.msra.mxu0 0.0
    %563 = vmatprep.subr.mxu0 0.0
    %564 = vmatpush1.msra.mxu0 0.0
    %565 = vmatprep.subr.mxu0 0.0
    %566 = vmatpush1.msra.mxu0 0.0
    %567 = vmatprep.subr.mxu0 0.0
    %568 = vmatpush1.msra.mxu0 0.0
    %569 = vmatprep.subr.mxu0 0.0
    %570 = vmatpush1.msra.mxu0 0.0
    %571 = vmatprep.subr.mxu0 0.0
    %572 = vmatpush1.msra.mxu0 0.0
    %573 = vmatprep.subr.mxu0 0.0
    %574 = vmatpush1.msra.mxu0 0.0
    %575 = vmatprep.subr.mxu0 0.0
    %576 = vmatpush1.msra.mxu0 0.0
    %577 = vmatprep.subr.mxu0 0.0
    %578 = vmatpush1.msra.mxu0 0.0
    %579 = vmatprep.subr.mxu0 0.0
    %580 = vmatpush1.msra.mxu0 0.0
    %581 = vmatprep.subr.mxu0 0.0
    %582 = vmatpush1.msra.mxu0 0.0
    %583 = vmatprep.subr.mxu0 0.0
    %584 = vmatpush1.msra.mxu0 0.0
    %585 = vmatprep.subr.mxu0 0.0
    %586 = vmatpush1.msra.mxu0 0.0
    %587 = vmatprep.subr.mxu0 0.0
    %588 = vmatpush1.msra.mxu0 0.0
    %589 = vmatprep.subr.mxu0 0.0
    %590 = vmatpush1.msra.mxu0 0.0
    %591 = vmatprep.subr.mxu0 0.0
    %592 = vmatpush1.msra.mxu0 0.0
    %593 = vmatprep.subr.mxu0 0.0
    %594 = vmatpush1.msra.mxu0 0.0
    %595 = vmatprep.subr.mxu0 0.0
    %596 = vmatpush1.msra.mxu0 0.0
    %597 = vmatprep.mubr.f32.mxu0 0.0
    %598 = vmatmul.mubr.f32.gmra.mrb[0].mxu0 %v289
    %v599 = vpop.f32.mrb[0].mxu0
    %v600 = vadd.f32 0.0, %v599
    %v601 = vpop.f32.mrb[0].mxu0
    %602 = vmatprep.mubr.f32.mxu0 0.0
    %603 = vmatmul.mubr.f32.gmra.mrb[0].mxu0 %v292
    %v604 = vpop.f32.mrb[0].mxu0
    %v605 = vadd.f32 0.0, %v604
    %v606 = vpop.f32.mrb[0].mxu0
    %607 = vdwg.mxu0
    %s608 = scalar_lea.vmem [#allocation9], 48
    %609 = vst [vmem:[%s608] sm:$0xff] %v600
    %610 = vst [vmem:[%s608 + $0x8] sm:$0xff] %v605
    %v611 = vld [vmem:[#allocation2 + $0x40] sm:$0xff]
    %v612 = vld [vmem:[#allocation2 + $0x48] sm:$0xff]
    %613 = vmatprep.subr.mxu0 0.0
    %614 = vmatpush1.msra.mxu0 %v611
    %615 = vmatprep.subr.mxu0 0.0
    %616 = vmatpush1.msra.mxu0 %v612
    %617 = vmatprep.subr.mxu0 0.0
    %618 = vmatpush1.msra.mxu0 0.0
    %619 = vmatprep.subr.mxu0 0.0
    %620 = vmatpush1.msra.mxu0 0.0
    %621 = vmatprep.subr.mxu0 0.0
    %622 = vmatpush1.msra.mxu0 0.0
    %623 = vmatprep.subr.mxu0 0.0
    %624 = vmatpush1.msra.mxu0 0.0
    %625 = vmatprep.subr.mxu0 0.0
    %626 = vmatpush1.msra.mxu0 0.0
    %627 = vmatprep.subr.mxu0 0.0
    %628 = vmatpush1.msra.mxu0 0.0
    %629 = vmatprep.subr.mxu0 0.0
    %630 = vmatpush1.msra.mxu0 0.0
    %631 = vmatprep.subr.mxu0 0.0
    %632 = vmatpush1.msra.mxu0 0.0
    %633 = vmatprep.subr.mxu0 0.0
    %634 = vmatpush1.msra.mxu0 0.0
    %635 = vmatprep.subr.mxu0 0.0
    %636 = vmatpush1.msra.mxu0 0.0
    %637 = vmatprep.subr.mxu0 0.0
    %638 = vmatpush1.msra.mxu0 0.0
    %639 = vmatprep.subr.mxu0 0.0
    %640 = vmatpush1.msra.mxu0 0.0
    %641 = vmatprep.subr.mxu0 0.0
    %642 = vmatpush1.msra.mxu0 0.0
    %643 = vmatprep.subr.mxu0 0.0
    %644 = vmatpush1.msra.mxu0 0.0
    %645 = vmatprep.subr.mxu0 0.0
    %646 = vmatpush1.msra.mxu0 0.0
    %647 = vmatprep.subr.mxu0 0.0
    %648 = vmatpush1.msra.mxu0 0.0
    %649 = vmatprep.subr.mxu0 0.0
    %650 = vmatpush1.msra.mxu0 0.0
    %651 = vmatprep.subr.mxu0 0.0
    %652 = vmatpush1.msra.mxu0 0.0
    %653 = vmatprep.subr.mxu0 0.0
    %654 = vmatpush1.msra.mxu0 0.0
    %655 = vmatprep.subr.mxu0 0.0
    %656 = vmatpush1.msra.mxu0 0.0
    %657 = vmatprep.subr.mxu0 0.0
    %658 = vmatpush1.msra.mxu0 0.0
    %659 = vmatprep.subr.mxu0 0.0
    %660 = vmatpush1.msra.mxu0 0.0
    %661 = vmatprep.subr.mxu0 0.0
    %662 = vmatpush1.msra.mxu0 0.0
    %663 = vmatprep.subr.mxu0 0.0
    %664 = vmatpush1.msra.mxu0 0.0
    %665 = vmatprep.subr.mxu0 0.0
    %666 = vmatpush1.msra.mxu0 0.0
    %667 = vmatprep.subr.mxu0 0.0
    %668 = vmatpush1.msra.mxu0 0.0
    %669 = vmatprep.subr.mxu0 0.0
    %670 = vmatpush1.msra.mxu0 0.0
    %671 = vmatprep.subr.mxu0 0.0
    %672 = vmatpush1.msra.mxu0 0.0
    %673 = vmatprep.subr.mxu0 0.0
    %674 = vmatpush1.msra.mxu0 0.0
    %675 = vmatprep.subr.mxu0 0.0
    %676 = vmatpush1.msra.mxu0 0.0
    %677 = vmatprep.mubr.f32.mxu0 0.0
    %678 = vmatmul.mubr.f32.gmra.mrb[0].mxu0 %v289
    %v679 = vpop.f32.mrb[0].mxu0
    %v680 = vadd.f32 0.0, %v679
    %v681 = vpop.f32.mrb[0].mxu0
    %682 = vmatprep.mubr.f32.mxu0 0.0
    %683 = vmatmul.mubr.f32.gmra.mrb[0].mxu0 %v292
    %v684 = vpop.f32.mrb[0].mxu0
    %v685 = vadd.f32 0.0, %v684
    %v686 = vpop.f32.mrb[0].mxu0
    %687 = vdwg.mxu0
    %s688 = scalar_lea.vmem [#allocation9], 64
    %689 = vst [vmem:[%s688] sm:$0xff] %v680
    %690 = vst [vmem:[%s688 + $0x8] sm:$0xff] %v685
    %v691 = vld [vmem:[#allocation2 + $0x50] sm:$0xff]
    %v692 = vld [vmem:[#allocation2 + $0x58] sm:$0xff]
    %693 = vmatprep.subr.mxu0 0.0
    %694 = vmatpush1.msra.mxu0 %v691
    %695 = vmatprep.subr.mxu0 0.0
    %696 = vmatpush1.msra.mxu0 %v692
    %697 = vmatprep.subr.mxu0 0.0
    %698 = vmatpush1.msra.mxu0 0.0
    %699 = vmatprep.subr.mxu0 0.0
    %700 = vmatpush1.msra.mxu0 0.0
    %701 = vmatprep.subr.mxu0 0.0
    %702 = vmatpush1.msra.mxu0 0.0
    %703 = vmatprep.subr.mxu0 0.0
    %704 = vmatpush1.msra.mxu0 0.0
    %705 = vmatprep.subr.mxu0 0.0
    %706 = vmatpush1.msra.mxu0 0.0
    %707 = vmatprep.subr.mxu0 0.0
    %708 = vmatpush1.msra.mxu0 0.0
    %709 = vmatprep.subr.mxu0 0.0
    %710 = vmatpush1.msra.mxu0 0.0
    %711 = vmatprep.subr.mxu0 0.0
    %712 = vmatpush1.msra.mxu0 0.0
    %713 = vmatprep.subr.mxu0 0.0
    %714 = vmatpush1.msra.mxu0 0.0
    %715 = vmatprep.subr.mxu0 0.0
    %716 = vmatpush1.msra.mxu0 0.0
    %717 = vmatprep.subr.mxu0 0.0
    %718 = vmatpush1.msra.mxu0 0.0
    %719 = vmatprep.subr.mxu0 0.0
    %720 = vmatpush1.msra.mxu0 0.0
    %721 = vmatprep.subr.mxu0 0.0
    %722 = vmatpush1.msra.mxu0 0.0
    %723 = vmatprep.subr.mxu0 0.0
    %724 = vmatpush1.msra.mxu0 0.0
    %725 = vmatprep.subr.mxu0 0.0
    %726 = vmatpush1.msra.mxu0 0.0
    %727 = vmatprep.subr.mxu0 0.0
    %728 = vmatpush1.msra.mxu0 0.0
    %729 = vmatprep.subr.mxu0 0.0
    %730 = vmatpush1.msra.mxu0 0.0
    %731 = vmatprep.subr.mxu0 0.0
    %732 = vmatpush1.msra.mxu0 0.0
    %733 = vmatprep.subr.mxu0 0.0
    %734 = vmatpush1.msra.mxu0 0.0
    %735 = vmatprep.subr.mxu0 0.0
    %736 = vmatpush1.msra.mxu0 0.0
    %737 = vmatprep.subr.mxu0 0.0
    %738 = vmatpush1.msra.mxu0 0.0
    %739 = vmatprep.subr.mxu0 0.0
    %740 = vmatpush1.msra.mxu0 0.0
    %741 = vmatprep.subr.mxu0 0.0
    %742 = vmatpush1.msra.mxu0 0.0
    %743 = vmatprep.subr.mxu0 0.0
    %744 = vmatpush1.msra.mxu0 0.0
    %745 = vmatprep.subr.mxu0 0.0
    %746 = vmatpush1.msra.mxu0 0.0
    %747 = vmatprep.subr.mxu0 0.0
    %748 = vmatpush1.msra.mxu0 0.0
    %749 = vmatprep.subr.mxu0 0.0
    %750 = vmatpush1.msra.mxu0 0.0
    %751 = vmatprep.subr.mxu0 0.0
    %752 = vmatpush1.msra.mxu0 0.0
    %753 = vmatprep.subr.mxu0 0.0
    %754 = vmatpush1.msra.mxu0 0.0
    %755 = vmatprep.subr.mxu0 0.0
    %756 = vmatpush1.msra.mxu0 0.0
    %757 = vmatprep.mubr.f32.mxu0 0.0
    %758 = vmatmul.mubr.f32.gmra.mrb[0].mxu0 %v289
    %v759 = vpop.f32.mrb[0].mxu0
    %v760 = vadd.f32 0.0, %v759
    %v761 = vpop.f32.mrb[0].mxu0
    %762 = vmatprep.mubr.f32.mxu0 0.0
    %763 = vmatmul.mubr.f32.gmra.mrb[0].mxu0 %v292
    %v764 = vpop.f32.mrb[0].mxu0
    %v765 = vadd.f32 0.0, %v764
    %v766 = vpop.f32.mrb[0].mxu0
    %767 = vdwg.mxu0
    %s768 = scalar_lea.vmem [#allocation9], 80
    %769 = vst [vmem:[%s768] sm:$0xff] %v760
    %770 = vst [vmem:[%s768 + $0x8] sm:$0xff] %v765
    %v771 = vld [vmem:[#allocation2 + $0x60] sm:$0xff]
    %v772 = vld [vmem:[#allocation2 + $0x68] sm:$0xff]
    %773 = vmatprep.subr.mxu0 0.0
    %774 = vmatpush1.msra.mxu0 %v771
    %775 = vmatprep.subr.mxu0 0.0
    %776 = vmatpush1.msra.mxu0 %v772
    %777 = vmatprep.subr.mxu0 0.0
    %778 = vmatpush1.msra.mxu0 0.0
    %779 = vmatprep.subr.mxu0 0.0
    %780 = vmatpush1.msra.mxu0 0.0
    %781 = vmatprep.subr.mxu0 0.0
    %782 = vmatpush1.msra.mxu0 0.0
    %783 = vmatprep.subr.mxu0 0.0
    %784 = vmatpush1.msra.mxu0 0.0
    %785 = vmatprep.subr.mxu0 0.0
    %786 = vmatpush1.msra.mxu0 0.0
    %787 = vmatprep.subr.mxu0 0.0
    %788 = vmatpush1.msra.mxu0 0.0
    %789 = vmatprep.subr.mxu0 0.0
    %790 = vmatpush1.msra.mxu0 0.0
    %791 = vmatprep.subr.mxu0 0.0
    %792 = vmatpush1.msra.mxu0 0.0
    %793 = vmatprep.subr.mxu0 0.0
    %794 = vmatpush1.msra.mxu0 0.0
    %795 = vmatprep.subr.mxu0 0.0
    %796 = vmatpush1.msra.mxu0 0.0
    %797 = vmatprep.subr.mxu0 0.0
    %798 = vmatpush1.msra.mxu0 0.0
    %799 = vmatprep.subr.mxu0 0.0
    %800 = vmatpush1.msra.mxu0 0.0
    %801 = vmatprep.subr.mxu0 0.0
    %802 = vmatpush1.msra.mxu0 0.0
    %803 = vmatprep.subr.mxu0 0.0
    %804 = vmatpush1.msra.mxu0 0.0
    %805 = vmatprep.subr.mxu0 0.0
    %806 = vmatpush1.msra.mxu0 0.0
    %807 = vmatprep.subr.mxu0 0.0
    %808 = vmatpush1.msra.mxu0 0.0
    %809 = vmatprep.subr.mxu0 0.0
    %810 = vmatpush1.msra.mxu0 0.0
    %811 = vmatprep.subr.mxu0 0.0
    %812 = vmatpush1.msra.mxu0 0.0
    %813 = vmatprep.subr.mxu0 0.0
    %814 = vmatpush1.msra.mxu0 0.0
    %815 = vmatprep.subr.mxu0 0.0
    %816 = vmatpush1.msra.mxu0 0.0
    %817 = vmatprep.subr.mxu0 0.0
    %818 = vmatpush1.msra.mxu0 0.0
    %819 = vmatprep.subr.mxu0 0.0
    %820 = vmatpush1.msra.mxu0 0.0
    %821 = vmatprep.subr.mxu0 0.0
    %822 = vmatpush1.msra.mxu0 0.0
    %823 = vmatprep.subr.mxu0 0.0
    %824 = vmatpush1.msra.mxu0 0.0
    %825 = vmatprep.subr.mxu0 0.0
    %826 = vmatpush1.msra.mxu0 0.0
    %827 = vmatprep.subr.mxu0 0.0
    %828 = vmatpush1.msra.mxu0 0.0
    %829 = vmatprep.subr.mxu0 0.0
    %830 = vmatpush1.msra.mxu0 0.0
    %831 = vmatprep.subr.mxu0 0.0
    %832 = vmatpush1.msra.mxu0 0.0
    %833 = vmatprep.subr.mxu0 0.0
    %834 = vmatpush1.msra.mxu0 0.0
    %835 = vmatprep.subr.mxu0 0.0
    %836 = vmatpush1.msra.mxu0 0.0
    %837 = vmatprep.mubr.f32.mxu0 0.0
    %838 = vmatmul.mubr.f32.gmra.mrb[0].mxu0 %v289
    %v839 = vpop.f32.mrb[0].mxu0
    %v840 = vadd.f32 0.0, %v839
    %v841 = vpop.f32.mrb[0].mxu0
    %842 = vmatprep.mubr.f32.mxu0 0.0
    %843 = vmatmul.mubr.f32.gmra.mrb[0].mxu0 %v292
    %v844 = vpop.f32.mrb[0].mxu0
    %v845 = vadd.f32 0.0, %v844
    %v846 = vpop.f32.mrb[0].mxu0
    %847 = vdwg.mxu0
    %s848 = scalar_lea.vmem [#allocation9], 96
    %849 = vst [vmem:[%s848] sm:$0xff] %v840
    %850 = vst [vmem:[%s848 + $0x8] sm:$0xff] %v845
    %v851 = vld [vmem:[#allocation2 + $0x70] sm:$0xff]
    %v852 = vld [vmem:[#allocation2 + $0x78] sm:$0xff]
    %853 = vmatprep.subr.mxu0 0.0
    %854 = vmatpush1.msra.mxu0 %v851
    %855 = vmatprep.subr.mxu0 0.0
    %856 = vmatpush1.msra.mxu0 %v852
    %857 = vmatprep.subr.mxu0 0.0
    %858 = vmatpush1.msra.mxu0 0.0
    %859 = vmatprep.subr.mxu0 0.0
    %860 = vmatpush1.msra.mxu0 0.0
    %861 = vmatprep.subr.mxu0 0.0
    %862 = vmatpush1.msra.mxu0 0.0
    %863 = vmatprep.subr.mxu0 0.0
    %864 = vmatpush1.msra.mxu0 0.0
    %865 = vmatprep.subr.mxu0 0.0
    %866 = vmatpush1.msra.mxu0 0.0
    %867 = vmatprep.subr.mxu0 0.0
    %868 = vmatpush1.msra.mxu0 0.0
    %869 = vmatprep.subr.mxu0 0.0
    %870 = vmatpush1.msra.mxu0 0.0
    %871 = vmatprep.subr.mxu0 0.0
    %872 = vmatpush1.msra.mxu0 0.0
    %873 = vmatprep.subr.mxu0 0.0
    %874 = vmatpush1.msra.mxu0 0.0
    %875 = vmatprep.subr.mxu0 0.0
    %876 = vmatpush1.msra.mxu0 0.0
    %877 = vmatprep.subr.mxu0 0.0
    %878 = vmatpush1.msra.mxu0 0.0
    %879 = vmatprep.subr.mxu0 0.0
    %880 = vmatpush1.msra.mxu0 0.0
    %881 = vmatprep.subr.mxu0 0.0
    %882 = vmatpush1.msra.mxu0 0.0
    %883 = vmatprep.subr.mxu0 0.0
    %884 = vmatpush1.msra.mxu0 0.0
    %885 = vmatprep.subr.mxu0 0.0
    %886 = vmatpush1.msra.mxu0 0.0
    %887 = vmatprep.subr.mxu0 0.0
    %888 = vmatpush1.msra.mxu0 0.0
    %889 = vmatprep.subr.mxu0 0.0
    %890 = vmatpush1.msra.mxu0 0.0
    %891 = vmatprep.subr.mxu0 0.0
    %892 = vmatpush1.msra.mxu0 0.0
    %893 = vmatprep.subr.mxu0 0.0
    %894 = vmatpush1.msra.mxu0 0.0
    %895 = vmatprep.subr.mxu0 0.0
    %896 = vmatpush1.msra.mxu0 0.0
    %897 = vmatprep.subr.mxu0 0.0
    %898 = vmatpush1.msra.mxu0 0.0
    %899 = vmatprep.subr.mxu0 0.0
    %900 = vmatpush1.msra.mxu0 0.0
    %901 = vmatprep.subr.mxu0 0.0
    %902 = vmatpush1.msra.mxu0 0.0
    %903 = vmatprep.subr.mxu0 0.0
    %904 = vmatpush1.msra.mxu0 0.0
    %905 = vmatprep.subr.mxu0 0.0
    %906 = vmatpush1.msra.mxu0 0.0
    %907 = vmatprep.subr.mxu0 0.0
    %908 = vmatpush1.msra.mxu0 0.0
    %909 = vmatprep.subr.mxu0 0.0
    %910 = vmatpush1.msra.mxu0 0.0
    %911 = vmatprep.subr.mxu0 0.0
    %912 = vmatpush1.msra.mxu0 0.0
    %913 = vmatprep.subr.mxu0 0.0
    %914 = vmatpush1.msra.mxu0 0.0
    %915 = vmatprep.subr.mxu0 0.0
    %916 = vmatpush1.msra.mxu0 0.0
    %917 = vmatprep.mubr.f32.mxu0 0.0
    %918 = vmatmul.mubr.f32.gmra.mrb[0].mxu0 %v289
    %v919 = vpop.f32.mrb[0].mxu0
    %v920 = vadd.f32 0.0, %v919
    %v921 = vpop.f32.mrb[0].mxu0
    %922 = vmatprep.mubr.f32.mxu0 0.0
    %923 = vmatmul.mubr.f32.gmra.mrb[0].mxu0 %v292
    %v924 = vpop.f32.mrb[0].mxu0
    %v925 = vadd.f32 0.0, %v924
    %v926 = vpop.f32.mrb[0].mxu0
    %927 = vdwg.mxu0
    %s928 = scalar_lea.vmem [#allocation9], 112
    %929 = vst [vmem:[%s928] sm:$0xff] %v920
    %930 = vst [vmem:[%s928 + $0x8] sm:$0xff] %v925
    // Predicated region
    $region26: #{tpu_custom_call.1} parent=1 // pred_check
      _
    $region27: #{tpu_custom_call.1} parent=1 // pred_check_branch
      %932 = sbr.rel (0) target = $region29
    $region28: #{tpu_custom_call.1} parent=1 // pred_region
      %s934 = ssub.s32 2048, 2048
      %935 = vsyncadd [#allocation5], %s934
      %s936 = sshll.u32 [#allocation9], 4
      %s937 = int_to_ptr.vmem [resolvable:$true] %s936
      %942 = dma.vmem_to_hbm [thread:$0]  %s937, 2048, %s3, [#allocation5], 128, 128, 8
    $region29: #{tpu_custom_call.1} parent=1 // pred_fallthru
      _
    // Predicated region
    $region30: #{tpu_custom_call.1} parent=1 // pred_check
      _
    $region31: #{tpu_custom_call.1} parent=1 // pred_check_branch
      %944 = sbr.rel (0) target = $region33
    $region32: #{tpu_custom_call.1} parent=1 // pred_region
      %945 = dma.done [#allocation5], 2048
    $region33: #{tpu_custom_call.1} parent=1 // pred_fallthru
      _
    %946 = vsyncpa [#allocation4], 1
    %947 = vsyncpa [#allocation7], 1
    %948 = vsyncpa [#allocation5], 1

</llo_original>
